<compile_context>
chip_gen: v5e
topology: v5e:2x2
jax: 0.10.0
libtpu: 0.0.40
codegen_flags: <defaults>
</compile_context>

<pallas_src>
import functools

import jax
import jax.numpy as jnp
from jax.experimental import pallas as pl
from jax.experimental.pallas import tpu as pltpu


def _round_up(x, m):
    return ((x + m - 1) // m) * m


def _choose_row_tile(m, target=512):
    """Row tile: large (<= ~512, mem-bound sweet spot), multiple of 16 for bf16
    sublane packing, prefer a multiple of 256 (full MXU pass) when tail padding
    stays negligible, and >= 2 grid steps for bigger M (v7x 2-TC split)."""
    n_tiles = pl.cdiv(m, target)
    if m > 256:
        n_tiles = max(n_tiles, 2)          # give v7x's two TensorCores work
    tm = _round_up(pl.cdiv(m, n_tiles), 16)
    tm_mxu = _round_up(tm, 256)
    if tm_mxu * n_tiles - m <= max(m // 16, 16):   # <~6% wasted rows is fine
        tm = tm_mxu
    return max(tm, 16)


def _vmem_budget():
    """Usable VMEM budget (85% of physical); assume v7x (64 MiB) if unknown."""
    try:
        info = pltpu.get_tpu_info()
        phys = getattr(info, "vmem_capacity_bytes", None) or (64 << 20)
    except Exception:  # pragma: no cover - query unsupported
        phys = 64 << 20
    return int(phys * 0.85)


def _mlp_fused_kernel(x_ref, *refs, num_layers, sigmoid_output):
    """One row-tile of the whole MLP.

    x_ref : (tm, P0) input rows (f32 or bf16; cast to bf16 at the dot).
    refs  : w0, b0, ..., w_{L-1}, b_{L-1}, o_ref
            weights bf16 (P_in, P_out), biases f32 (1, P_out), output (tm, P_last).
    """
    o_ref = refs[-1]
    h = x_ref[...]
    for i in range(num_layers):
        w = refs[2 * i][...]                       # (P_in, P_out) bf16, resident
        b = refs[2 * i + 1][...]                   # (1, P_out)    f32
        acc = jnp.dot(h.astype(jnp.bfloat16), w,
                      preferred_element_type=jnp.float32)   # MXU, f32 acc
        acc = acc + b                              # bias + activation in f32
        if i < num_layers - 1:
            acc = jnp.maximum(acc, 0.0)            # ReLU
        elif sigmoid_output:
            acc = jax.nn.sigmoid(acc)
        h = acc
    o_ref[...] = h.astype(o_ref.dtype)


def _linear_kernel(x_ref, w_ref, b_ref, o_ref, *, relu, sigmoid):
    """Single Linear(+activation) layer — fallback path for huge weight sets."""
    acc = jnp.dot(x_ref[...].astype(jnp.bfloat16), w_ref[...],
                  preferred_element_type=jnp.float32)
    acc = acc + b_ref[...]
    if relu:
        acc = jnp.maximum(acc, 0.0)
    if sigmoid:
        acc = jax.nn.sigmoid(acc)
    o_ref[...] = acc.astype(o_ref.dtype)


class MLPPallas:
    """JAX/Pallas port of the PyTorch MLP module (forward pass)."""

    def __init__(self, input_dim, hidden_dim, output_dim, num_layers,
                 sigmoid_output=False, *, key=None, dtype=jnp.float32,
                 force_per_layer=False):
        self.num_layers = num_layers
        self.sigmoid_output = sigmoid_output
        self.input_dim = input_dim
        self.output_dim = output_dim
        self.force_per_layer = force_per_layer

        h = [hidden_dim] * (num_layers - 1)
        dims = list(zip([input_dim] + h, h + [output_dim]))
        if key is None:
            key = jax.random.PRNGKey(0)

        # Params stored as (in_features, out_features) so the hot path is x @ W + b.
        self.params = []
        for (n_in, n_out) in dims:
            key, kw, kb = jax.random.split(key, 3)
            bound = 1.0 / (n_in ** 0.5)   # mimic nn.Linear U(-1/sqrt(fan_in), +)
            w = jax.random.uniform(kw, (n_in, n_out), dtype, -bound, bound)
            b = jax.random.uniform(kb, (n_out,), dtype, -bound, bound)
            self.params.append((w, b))

        # Lane-dense zero padding (multiples of 128) + bf16 weights for the MXU.
        self._padded_dims = [_round_up(d, 128) for d in [input_dim] + h + [output_dim]]
        self._padded = []
        for li, (w, b) in enumerate(self.params):
            p_in, p_out = self._padded_dims[li], self._padded_dims[li + 1]
            wp = jnp.zeros((p_in, p_out), jnp.float32)
            wp = wp.at[: w.shape[0], : w.shape[1]].set(w)
            bp = jnp.zeros((1, p_out), jnp.float32)
            bp = bp.at[0, : b.shape[0]].set(b)
            self._padded.append((wp.astype(jnp.bfloat16), bp))

        # Resident-weight footprint for the fused path (single-buffered).
        self._weight_bytes = sum(int(w.size) * 2 + int(b.size) * 4
                                 for w, b in self._padded)

    # ----------------------------------------------------------------- helpers
    def _fused_vmem_bytes(self, tm, in_itemsize, out_itemsize):
        p0, p_last = self._padded_dims[0], self._padded_dims[-1]
        io = 2 * tm * p0 * in_itemsize + 2 * tm * p_last * out_itemsize  # dbl-buffered
        acts = sum(tm * d * 4 for d in self._padded_dims)                # f32 temps
        return self._weight_bytes + io + acts

    def _fused_call(self, x_in, m_pad, tm, out_dtype, est_bytes, budget):
        p0, p_last = self._padded_dims[0], self._padded_dims[-1]
        kernel = functools.partial(_mlp_fused_kernel,
                                   num_layers=self.num_layers,
                                   sigmoid_output=self.sigmoid_output)
        in_specs = [pl.BlockSpec((tm, p0), lambda i: (i, 0))]
        flat_wb = []
        for (wp, bp) in self._padded:
            p_in, p_out = wp.shape
            # Constant index_map + single buffering: fetched once, no 2x VMEM.
            in_specs.append(pl.BlockSpec((p_in, p_out), lambda i: (0, 0),
                                         pipeline_mode=pl.Buffered(1)))
            in_specs.append(pl.BlockSpec((1, p_out), lambda i: (0, 0),
                                         pipeline_mode=pl.Buffered(1)))
            flat_wb += [wp, bp]

        vmem_limit = int(min(max(est_bytes * 3 // 2 + (4 << 20), 32 << 20), budget))
        return pl.pallas_call(
            kernel,
            out_shape=jax.ShapeDtypeStruct((m_pad, p_last), out_dtype),
            grid=(m_pad // tm,),
            in_specs=in_specs,
            out_specs=pl.BlockSpec((tm, p_last), lambda i: (i, 0)),
            compiler_params=pltpu.CompilerParams(
                dimension_semantics=("parallel",),
                vmem_limit_bytes=vmem_limit),
        )(x_in, *flat_wb)

    def _per_layer_call(self, x_in, m_pad, tm, out_dtype, budget):
        # Fallback when the all-weights-resident working set would not fit VMEM
        # (e.g. very wide hidden dims on v7x): one pallas_call per layer,
        # intermediates round-trip HBM in bf16 (same values enter the next dot).
        # TODO(synk): also tile over N/K for layers whose single weight matrix
        # exceeds the VMEM budget by itself.
        h = x_in
        for li, (wp, bp) in enumerate(self._padded):
            p_in, p_out = wp.shape
            last = li == self.num_layers - 1
            kernel = functools.partial(_linear_kernel,
                                       relu=not last,
                                       sigmoid=last and self.sigmoid_output)
            layer_dtype = out_dtype if last else jnp.bfloat16
            est = (int(wp.size) * 2 + int(bp.size) * 4
                   + 2 * tm * p_in * jnp.dtype(h.dtype).itemsize
                   + 2 * tm * p_out * jnp.dtype(layer_dtype).itemsize)
            vmem_limit = int(min(max(est * 3 // 2 + (4 << 20), 32 << 20), budget))
            h = pl.pallas_call(
                kernel,
                out_shape=jax.ShapeDtypeStruct((m_pad, p_out), layer_dtype),
                grid=(m_pad // tm,),
                in_specs=[pl.BlockSpec((tm, p_in), lambda i: (i, 0)),
                          pl.BlockSpec((p_in, p_out), lambda i: (0, 0),
                                       pipeline_mode=pl.Buffered(1)),
                          pl.BlockSpec((1, p_out), lambda i: (0, 0),
                                       pipeline_mode=pl.Buffered(1))],
                out_specs=pl.BlockSpec((tm, p_out), lambda i: (i, 0)),
                compiler_params=pltpu.CompilerParams(
                    dimension_semantics=("parallel",),
                    vmem_limit_bytes=vmem_limit),
            )(h, wp, bp)
        return h

    # ------------------------------------------------------------------ public
    def __call__(self, x):
        lead = x.shape[:-1]
        x2d = x.reshape(-1, x.shape[-1])
        M = x2d.shape[0]
        out_dtype = x.dtype
        p0 = self._padded_dims[0]

        tm = _choose_row_tile(M)
        m_pad = _round_up(M, tm)

        # Skip the host-side pad/cast pass over x entirely when no padding is
        # needed (feature dim 128-aligned, rows divide tm): the kernel casts to
        # bf16 right before the dot.
        if m_pad == M and p0 == self.input_dim:
            x_in = x2d
        else:
            xp = jnp.zeros((m_pad, p0), jnp.bfloat16)
            x_in = xp.at[:M, : self.input_dim].set(x2d.astype(jnp.bfloat16))

        in_itemsize = jnp.dtype(x_in.dtype).itemsize
        out_itemsize = jnp.dtype(out_dtype).itemsize

        budget = _vmem_budget()
        fused_bytes = self._fused_vmem_bytes(tm, in_itemsize, out_itemsize)

        if (not self.force_per_layer) and fused_bytes <= budget:
            out = self._fused_call(x_in, m_pad, tm, out_dtype, fused_bytes, budget)
        else:
            out = self._per_layer_call(x_in, m_pad, tm, out_dtype, budget)

        y = out[:M, : self.output_dim]
        return y.reshape(*lead, self.output_dim)


def _reference(x, params, num_layers, sigmoid_output):
    """Pure-JAX reference using the same bf16-operand / f32-accumulate recipe."""
    lead = x.shape[:-1]
    y = x.reshape(-1, x.shape[-1]).astype(jnp.float32)
    for i, (w, b) in enumerate(params):
        y = jnp.dot(y.astype(jnp.bfloat16), w.astype(jnp.bfloat16),
                    preferred_element_type=jnp.float32) + b.astype(jnp.float32)
        if i < num_layers - 1:
            y = jnp.maximum(y, 0.0)
    if sigmoid_output:
        y = jax.nn.sigmoid(y)
    return y.reshape(*lead, y.shape[-1])


if __name__ == "__main__":
    key = jax.random.PRNGKey(0)
    k_x, k_p, k_x2, k_p2 = jax.random.split(key, 4)

    batch, seq = 2, 8

    # Case 1: unaligned feature dims (exercises the pad/cast path).
    input_dim, hidden_dim, output_dim, num_layers = 32, 64, 16, 3
    x = jax.random.normal(k_x, (batch, seq, input_dim), jnp.float32)
    mlp = MLPPallas(input_dim, hidden_dim, output_dim, num_layers,
                    sigmoid_output=False, key=k_p)
    out = jax.block_until_ready(mlp(x))
    ref = _reference(x, mlp.params, num_layers, mlp.sigmoid_output)
    assert out.shape == (batch, seq, output_dim)
    assert jnp.allclose(out, ref, atol=1e-3, rtol=1e-3), "case1 mismatch"

    # Case 2: 128-aligned dims + sigmoid head (exercises the zero-copy path).
    input_dim2, hidden_dim2, output_dim2, num_layers2 = 128, 256, 128, 2
    x2 = jax.random.normal(k_x2, (batch, seq, input_dim2), jnp.float32)
    mlp2 = MLPPallas(input_dim2, hidden_dim2, output_dim2, num_layers2,
                     sigmoid_output=True, key=k_p2)
    out2 = jax.block_until_ready(mlp2(x2))
    ref2 = _reference(x2, mlp2.params, num_layers2, True)
    assert out2.shape == (batch, seq, output_dim2)
    assert jnp.allclose(out2, ref2, atol=1e-3, rtol=1e-3), "case2 mismatch"

    # Case 3: force the per-layer fallback path (VMEM-budget overflow route).
    mlp3 = MLPPallas(input_dim, hidden_dim, output_dim, num_layers,
                     sigmoid_output=False, key=k_p, force_per_layer=True)
    out3 = jax.block_until_ready(mlp3(x))
    assert jnp.allclose(out3, ref, atol=1e-3, rtol=1e-3), "case3 mismatch"

    print("KERNEL_OK")
</pallas_src>

<mosaic_0001>
module attributes {stable_mosaic.version = 11 : i64} {
  func.func @_mlp_fused_kernel(%arg0: i32, %arg1: memref<16x128xbf16, #tpu.memory_space<vmem>>, %arg2: memref<128x128xbf16, #tpu.memory_space<vmem>>, %arg3: memref<1x128xf32, #tpu.memory_space<vmem>>, %arg4: memref<128x128xbf16, #tpu.memory_space<vmem>>, %arg5: memref<1x128xf32, #tpu.memory_space<vmem>>, %arg6: memref<128x128xbf16, #tpu.memory_space<vmem>>, %arg7: memref<1x128xf32, #tpu.memory_space<vmem>>, %arg8: memref<16x128xf32, #tpu.memory_space<vmem>>) attributes {dimension_semantics = [#tpu.dimension_semantics<parallel>], iteration_bounds = array<i64: 1>, scalar_prefetch = 0 : i64, scratch_operands = 0 : i64, tpu.core_type = #tpu.core_type<tc>, window_params = [{transform_indices = @transform_0, window_bounds = array<i64: 16, 128>}, {pipeline_mode = #tpu.pipeline_mode<synchronous>, transform_indices = @transform_1, window_bounds = array<i64: 128, 128>}, {pipeline_mode = #tpu.pipeline_mode<synchronous>, transform_indices = @transform_2, window_bounds = array<i64: 1, 128>}, {pipeline_mode = #tpu.pipeline_mode<synchronous>, transform_indices = @transform_3, window_bounds = array<i64: 128, 128>}, {pipeline_mode = #tpu.pipeline_mode<synchronous>, transform_indices = @transform_4, window_bounds = array<i64: 1, 128>}, {pipeline_mode = #tpu.pipeline_mode<synchronous>, transform_indices = @transform_5, window_bounds = array<i64: 128, 128>}, {pipeline_mode = #tpu.pipeline_mode<synchronous>, transform_indices = @transform_6, window_bounds = array<i64: 1, 128>}, {transform_indices = @transform_7, window_bounds = array<i64: 16, 128>}]} {
    %c0 = arith.constant 0 : index
    %c0_0 = arith.constant 0 : index
    %0 = vector.load %arg1[%c0, %c0_0] : memref<16x128xbf16, #tpu.memory_space<vmem>>, vector<16x128xbf16>
    %c0_1 = arith.constant 0 : index
    %c0_2 = arith.constant 0 : index
    %1 = vector.load %arg2[%c0_1, %c0_2] : memref<128x128xbf16, #tpu.memory_space<vmem>>, vector<128x128xbf16>
    %c0_3 = arith.constant 0 : index
    %c0_4 = arith.constant 0 : index
    %2 = vector.load %arg3[%c0_3, %c0_4] : memref<1x128xf32, #tpu.memory_space<vmem>>, vector<1x128xf32>
    %cst = arith.constant dense<0.000000e+00> : vector<16x128xf32>
    %3 = tpu.matmul %0, %1, %cst {dimension_numbers = #tpu.dot_dimension_numbers<[1], [0], [0], [1], [0, 0, 1, 1], [], []>} : vector<16x128xbf16>, vector<128x128xbf16>, vector<16x128xf32> -> vector<16x128xf32>
    %4 = vector.broadcast %2 : vector<1x128xf32> to vector<16x128xf32>
    %5 = arith.addf %3, %4 : vector<16x128xf32>
    %cst_5 = arith.constant 0.000000e+00 : f32
    %6 = vector.broadcast %cst_5 : f32 to vector<16x128xf32>
    %7 = arith.maximumf %5, %6 : vector<16x128xf32>
    %c0_6 = arith.constant 0 : index
    %c0_7 = arith.constant 0 : index
    %8 = vector.load %arg4[%c0_6, %c0_7] : memref<128x128xbf16, #tpu.memory_space<vmem>>, vector<128x128xbf16>
    %c0_8 = arith.constant 0 : index
    %c0_9 = arith.constant 0 : index
    %9 = vector.load %arg5[%c0_8, %c0_9] : memref<1x128xf32, #tpu.memory_space<vmem>>, vector<1x128xf32>
    %10 = arith.truncf %7 : vector<16x128xf32> to vector<16x128xbf16>
    %cst_10 = arith.constant dense<0.000000e+00> : vector<16x128xf32>
    %11 = tpu.matmul %10, %8, %cst_10 {dimension_numbers = #tpu.dot_dimension_numbers<[1], [0], [0], [1], [0, 0, 1, 1], [], []>} : vector<16x128xbf16>, vector<128x128xbf16>, vector<16x128xf32> -> vector<16x128xf32>
    %12 = vector.broadcast %9 : vector<1x128xf32> to vector<16x128xf32>
    %13 = arith.addf %11, %12 : vector<16x128xf32>
    %cst_11 = arith.constant 0.000000e+00 : f32
    %14 = vector.broadcast %cst_11 : f32 to vector<16x128xf32>
    %15 = arith.maximumf %13, %14 : vector<16x128xf32>
    %c0_12 = arith.constant 0 : index
    %c0_13 = arith.constant 0 : index
    %16 = vector.load %arg6[%c0_12, %c0_13] : memref<128x128xbf16, #tpu.memory_space<vmem>>, vector<128x128xbf16>
    %c0_14 = arith.constant 0 : index
    %c0_15 = arith.constant 0 : index
    %17 = vector.load %arg7[%c0_14, %c0_15] : memref<1x128xf32, #tpu.memory_space<vmem>>, vector<1x128xf32>
    %18 = arith.truncf %15 : vector<16x128xf32> to vector<16x128xbf16>
    %cst_16 = arith.constant dense<0.000000e+00> : vector<16x128xf32>
    %19 = tpu.matmul %18, %16, %cst_16 {dimension_numbers = #tpu.dot_dimension_numbers<[1], [0], [0], [1], [0, 0, 1, 1], [], []>} : vector<16x128xbf16>, vector<128x128xbf16>, vector<16x128xf32> -> vector<16x128xf32>
    %20 = vector.broadcast %17 : vector<1x128xf32> to vector<16x128xf32>
    %21 = arith.addf %19, %20 : vector<16x128xf32>
    %c0_17 = arith.constant 0 : index
    %c0_18 = arith.constant 0 : index
    %22 = vector.load %arg8[%c0_17, %c0_18] : memref<16x128xf32, #tpu.memory_space<vmem>>, vector<16x128xf32>
    tpu.vector_store %arg8[%c0_17, %c0_18], %21 {strides = array<i32>} : memref<16x128xf32, #tpu.memory_space<vmem>>, vector<16x128xf32>,
    return
  }
  func.func @transform_0(%arg0: i32) -> (i32, i32) {
    %c0_i32 = arith.constant 0 : i32
    %c0_i32_0 = arith.constant 0 : i32
    return %arg0, %c0_i32 : i32, i32
  }
  func.func @transform_1(%arg0: i32) -> (i32, i32) {
    %c0_i32 = arith.constant 0 : i32
    %c0_i32_0 = arith.constant 0 : i32
    %c0_i32_1 = arith.constant 0 : i32
    return %c0_i32, %c0_i32_0 : i32, i32
  }
  func.func @transform_2(%arg0: i32) -> (i32, i32) {
    %c0_i32 = arith.constant 0 : i32
    %c0_i32_0 = arith.constant 0 : i32
    %c0_i32_1 = arith.constant 0 : i32
    return %c0_i32, %c0_i32_0 : i32, i32
  }
  func.func @transform_3(%arg0: i32) -> (i32, i32) {
    %c0_i32 = arith.constant 0 : i32
    %c0_i32_0 = arith.constant 0 : i32
    %c0_i32_1 = arith.constant 0 : i32
    return %c0_i32, %c0_i32_0 : i32, i32
  }
  func.func @transform_4(%arg0: i32) -> (i32, i32) {
    %c0_i32 = arith.constant 0 : i32
    %c0_i32_0 = arith.constant 0 : i32
    %c0_i32_1 = arith.constant 0 : i32
    return %c0_i32, %c0_i32_0 : i32, i32
  }
  func.func @transform_5(%arg0: i32) -> (i32, i32) {
    %c0_i32 = arith.constant 0 : i32
    %c0_i32_0 = arith.constant 0 : i32
    %c0_i32_1 = arith.constant 0 : i32
    return %c0_i32, %c0_i32_0 : i32, i32
  }
  func.func @transform_6(%arg0: i32) -> (i32, i32) {
    %c0_i32 = arith.constant 0 : i32
    %c0_i32_0 = arith.constant 0 : i32
    %c0_i32_1 = arith.constant 0 : i32
    return %c0_i32, %c0_i32_0 : i32, i32
  }
  func.func @transform_7(%arg0: i32) -> (i32, i32) {
    %c0_i32 = arith.constant 0 : i32
    %c0_i32_0 = arith.constant 0 : i32
    return %arg0, %c0_i32 : i32, i32
  }
}

</mosaic_0001>

<llo_original>
// kernel: tpu_custom_call.1
$region0: #{tpu_custom_call.1}
  #allocation0 [shape = 'u32[]', space=smem, size = 0x4, offset = 0x4, fixed_abs, tag = 'smem constant byte address 0x4 - core index']
  #allocation1 [shape = 'u32[72,128]{1,0:T(1,128)}', space=vmem, size = 0x9000, scoped, tag = 'internal scratch']
  %s0 = inlined_call_operand.hbm [shape: bf16[16,128], index: 0, kind: input, shape index: {}]
  %s1 = inlined_call_operand.hbm [shape: bf16[128,128], index: 1, kind: input, shape index: {}]
  %s2 = inlined_call_operand.vmem [shape: f32[1,128], index: 2, kind: input, shape index: {}]
  %s3 = inlined_call_operand.hbm [shape: bf16[128,128], index: 3, kind: input, shape index: {}]
  %s4 = inlined_call_operand.vmem [shape: f32[1,128], index: 4, kind: input, shape index: {}]
  %s5 = inlined_call_operand.hbm [shape: bf16[128,128], index: 5, kind: input, shape index: {}]
  %s6 = inlined_call_operand.vmem [shape: f32[1,128], index: 6, kind: input, shape index: {}]
  %s7 = inlined_call_operand.hbm [shape: f32[16,128], index: 7, kind: output, shape index: {}]
  %s8 = sld [smem:[#allocation0]]
  $region54: #{tpu_custom_call.1} parent=0
    _
  %s10 = ssub.s32 1, %s8
  %s11 = scalar_select 0, %s10, %s8
  $region1: #{tpu_custom_call.1} parent=0
    #allocation2 [shape = 'u8[4096]{0}', space=vmem, size = 0x1000, scoped, tag = 'input window, operand 0, single buffered']
    #allocation3 [shape = 's32[1]{0}', space=sflag, size = 0x4, scoped, tag = 'scoped memory for tpu_custom_call.1']
    #allocation4 [shape = 's32[1]{0}', space=sflag, size = 0x4, scoped, tag = 'scoped memory for tpu_custom_call.1']
    #allocation5 [shape = 'u8[32768]{0}', space=vmem, size = 0x8000, scoped, tag = 'input window, operand 1, single buffered']
    #allocation6 [shape = 's32[1]{0}', space=sflag, size = 0x4, scoped, tag = 'scoped memory for tpu_custom_call.1']
    #allocation7 [shape = 'u8[32768]{0}', space=vmem, size = 0x8000, scoped, tag = 'input window, operand 3, single buffered']
    #allocation8 [shape = 'u8[32768]{0}', space=vmem, size = 0x8000, scoped, tag = 'input window, operand 5, single buffered']
    #allocation9 [shape = 's32[1]{0}', space=sflag, size = 0x4, scoped, tag = 'scoped memory for tpu_custom_call.1']
    #allocation10 [shape = 'u8[8192]{0}', space=vmem, size = 0x2000, scoped, tag = 'output window, operand 0, single buffered']
    %12 = vsyncpa [#allocation3], 0
    %13 = vsyncpa [#allocation6], 0
    %14 = vsyncpa [#allocation9], 0
    %15 = vsyncpa [#allocation4], 0
    // Predicated region
    $region2: #{tpu_custom_call.1} parent=1 // pred_check
      _
    $region3: #{tpu_custom_call.1} parent=1 // pred_check_branch
      %17 = sbr.rel (0) target = $region5
    $region4: #{tpu_custom_call.1} parent=1 // pred_region
      %19 = vsyncadd [#allocation3], 0
      %s20 = sshll.u32 %s0, 4
      %s21 = int_to_ptr.hbm [resolvable:$true] %s20
      %s22 = sshll.u32 [#allocation2], 4
      %s23 = int_to_ptr.vmem [resolvable:$true] %s22
      %28 = dma.hbm_to_vmem [thread:$0]  %s21, 128, %s23, [#allocation3], 64, 64, 4
    $region5: #{tpu_custom_call.1} parent=1 // pred_fallthru
      _
    // Predicated region
    $region6: #{tpu_custom_call.1} parent=1 // pred_check
      _
    $region7: #{tpu_custom_call.1} parent=1 // pred_check_branch
      %30 = sbr.rel (0) target = $region9
    $region8: #{tpu_custom_call.1} parent=1 // pred_region
      %32 = vsyncadd [#allocation6], 0
      %s33 = sshll.u32 %s1, 4
      %s34 = int_to_ptr.hbm [resolvable:$true] %s33
      %s35 = sshll.u32 [#allocation5], 4
      %s36 = int_to_ptr.vmem [resolvable:$true] %s35
      %41 = dma.hbm_to_vmem [thread:$0]  %s34, 1024, %s36, [#allocation6], 64, 64, 4
    $region9: #{tpu_custom_call.1} parent=1 // pred_fallthru
      _
    // Predicated region
    $region10: #{tpu_custom_call.1} parent=1 // pred_check
      _
    $region11: #{tpu_custom_call.1} parent=1 // pred_check_branch
      %43 = sbr.rel (0) target = $region13
    $region12: #{tpu_custom_call.1} parent=1 // pred_region
      _
    $region13: #{tpu_custom_call.1} parent=1 // pred_fallthru
      _
    // Predicated region
    $region14: #{tpu_custom_call.1} parent=1 // pred_check
      _
    $region15: #{tpu_custom_call.1} parent=1 // pred_check_branch
      %45 = sbr.rel (0) target = $region17
    $region16: #{tpu_custom_call.1} parent=1 // pred_region
      %47 = vsyncadd [#allocation6], 0
      %s48 = sshll.u32 %s3, 4
      %s49 = int_to_ptr.hbm [resolvable:$true] %s48
      %s50 = sshll.u32 [#allocation7], 4
      %s51 = int_to_ptr.vmem [resolvable:$true] %s50
      %56 = dma.hbm_to_vmem [thread:$0]  %s49, 1024, %s51, [#allocation6], 64, 64, 4
    $region17: #{tpu_custom_call.1} parent=1 // pred_fallthru
      _
    // Predicated region
    $region18: #{tpu_custom_call.1} parent=1 // pred_check
      _
    $region19: #{tpu_custom_call.1} parent=1 // pred_check_branch
      %58 = sbr.rel (0) target = $region21
    $region20: #{tpu_custom_call.1} parent=1 // pred_region
      _
    $region21: #{tpu_custom_call.1} parent=1 // pred_fallthru
      _
    // Predicated region
    $region22: #{tpu_custom_call.1} parent=1 // pred_check
      _
    $region23: #{tpu_custom_call.1} parent=1 // pred_check_branch
      %60 = sbr.rel (0) target = $region25
    $region24: #{tpu_custom_call.1} parent=1 // pred_region
      %62 = vsyncadd [#allocation9], 0
      %s63 = sshll.u32 %s5, 4
      %s64 = int_to_ptr.hbm [resolvable:$true] %s63
      %s65 = sshll.u32 [#allocation8], 4
      %s66 = int_to_ptr.vmem [resolvable:$true] %s65
      %71 = dma.hbm_to_vmem [thread:$0]  %s64, 1024, %s66, [#allocation9], 64, 64, 4
    $region25: #{tpu_custom_call.1} parent=1 // pred_fallthru
      _
    // Predicated region
    $region26: #{tpu_custom_call.1} parent=1 // pred_check
      _
    $region27: #{tpu_custom_call.1} parent=1 // pred_check_branch
      %73 = sbr.rel (0) target = $region29
    $region28: #{tpu_custom_call.1} parent=1 // pred_region
      _
    $region29: #{tpu_custom_call.1} parent=1 // pred_fallthru
      _
    // Predicated region
    $region30: #{tpu_custom_call.1} parent=1 // pred_check
      _
    $region31: #{tpu_custom_call.1} parent=1 // pred_check_branch
      %75 = sbr.rel (0) target = $region33
    $region32: #{tpu_custom_call.1} parent=1 // pred_region
      %77 = dma.done [#allocation3], 128
    $region33: #{tpu_custom_call.1} parent=1 // pred_fallthru
      _
    // Predicated region
    $region34: #{tpu_custom_call.1} parent=1 // pred_check
      _
    $region35: #{tpu_custom_call.1} parent=1 // pred_check_branch
      %79 = sbr.rel (0) target = $region37
    $region36: #{tpu_custom_call.1} parent=1 // pred_region
      %81 = dma.done [#allocation6], 1024
    $region37: #{tpu_custom_call.1} parent=1 // pred_fallthru
      _
    // Predicated region
    $region38: #{tpu_custom_call.1} parent=1 // pred_check
      _
    $region39: #{tpu_custom_call.1} parent=1 // pred_check_branch
      %83 = sbr.rel (0) target = $region41
    $region40: #{tpu_custom_call.1} parent=1 // pred_region
      %85 = dma.done [#allocation6], 1024
    $region41: #{tpu_custom_call.1} parent=1 // pred_fallthru
      _
    // Predicated region
    $region42: #{tpu_custom_call.1} parent=1 // pred_check
      _
    $region43: #{tpu_custom_call.1} parent=1 // pred_check_branch
      %87 = sbr.rel (0) target = $region45
    $region44: #{tpu_custom_call.1} parent=1 // pred_region
      %89 = dma.done [#allocation9], 1024
    $region45: #{tpu_custom_call.1} parent=1 // pred_fallthru
      _
    %v90 = vld [vmem:[#allocation2] sm:$0xf]
    %v91 = vld [vmem:[#allocation2 + $0x4] sm:$0xf]
    %v92 = vld [vmem:[#allocation5] sm:$0xf]
    %v93 = vld [vmem:[#allocation5 + $0x4] sm:$0xf]
    %v94 = vld [vmem:[#allocation5 + $0x8] sm:$0xf]
    %v95 = vld [vmem:[#allocation5 + $0xc] sm:$0xf]
    %v96 = vld [vmem:[#allocation5 + $0x10] sm:$0xf]
    %v97 = vld [vmem:[#allocation5 + $0x14] sm:$0xf]
    %v98 = vld [vmem:[#allocation5 + $0x18] sm:$0xf]
    %v99 = vld [vmem:[#allocation5 + $0x1c] sm:$0xf]
    %v100 = vld [vmem:[#allocation5 + $0x20] sm:$0xf]
    %v101 = vld [vmem:[#allocation5 + $0x24] sm:$0xf]
    %v102 = vld [vmem:[#allocation5 + $0x28] sm:$0xf]
    %v103 = vld [vmem:[#allocation5 + $0x2c] sm:$0xf]
    %v104 = vld [vmem:[#allocation5 + $0x30] sm:$0xf]
    %v105 = vld [vmem:[#allocation5 + $0x34] sm:$0xf]
    %v106 = vld [vmem:[#allocation5 + $0x38] sm:$0xf]
    %v107 = vld [vmem:[#allocation5 + $0x3c] sm:$0xf]
    %v108 = vld [vmem:[%s2] sm:$0x1]
    %v110 = vperm.slane %v108, 0
    %v114 = vunpack.c.l.b16 %v90
    %v115 = vunpack.c.l.b16 %v91
    %v116 = vpack.c.b16 %v115, %v114
    %v134 = vunpack.c.l.b16 %v92
    %v135 = vunpack.c.l.b16 %v93
    %v136 = vunpack.c.l.b16 %v94
    %v137 = vunpack.c.l.b16 %v95
    %v138 = vunpack.c.l.b16 %v96
    %v139 = vunpack.c.l.b16 %v97
    %v140 = vunpack.c.l.b16 %v98
    %v141 = vunpack.c.l.b16 %v99
    %v142 = vunpack.c.l.b16 %v100
    %v143 = vunpack.c.l.b16 %v101
    %v144 = vunpack.c.l.b16 %v102
    %v145 = vunpack.c.l.b16 %v103
    %v146 = vunpack.c.l.b16 %v104
    %v147 = vunpack.c.l.b16 %v105
    %v148 = vunpack.c.l.b16 %v106
    %v149 = vunpack.c.l.b16 %v107
    %v150 = vpack.c.b16 %v135, %v134
    %v151 = vpack.c.b16 %v137, %v136
    %v152 = vpack.c.b16 %v139, %v138
    %v153 = vpack.c.b16 %v141, %v140
    %v154 = vpack.c.b16 %v143, %v142
    %v155 = vpack.c.b16 %v145, %v144
    %v156 = vpack.c.b16 %v147, %v146
    %v157 = vpack.c.b16 %v149, %v148
    %166 = vmatpush.bf16.msra.mxu0 %v157
    %167 = vmatpush.bf16.msra.mxu0 %v156
    %168 = vmatpush.bf16.msra.mxu0 %v155
    %169 = vmatpush.bf16.msra.mxu0 %v154
    %170 = vmatpush.bf16.msra.mxu0 %v153
    %171 = vmatpush.bf16.msra.mxu0 %v152
    %172 = vmatpush.bf16.msra.mxu0 %v151
    %173 = vmatpush.bf16.msra.mxu0 %v150
    %174 = vmatmul.bf16.gmra.mxu0 %v116
    %v175 = vpop.f32.mrf.mxu0
    %v176 = vadd.f32 %v110, %v175
    %v177 = vpop.f32.mrf.mxu0
    %v178 = vadd.f32 %v110, %v177
    %179 = vdwg.mxu0
    %v180 = vmax.f32 %v176, 0.0
    %v181 = vmax.f32 %v178, 0.0
    %v182 = vld [vmem:[#allocation7] sm:$0xf]
    %v183 = vld [vmem:[#allocation7 + $0x4] sm:$0xf]
    %v184 = vld [vmem:[#allocation7 + $0x8] sm:$0xf]
    %v185 = vld [vmem:[#allocation7 + $0xc] sm:$0xf]
    %v186 = vld [vmem:[#allocation7 + $0x10] sm:$0xf]
    %v187 = vld [vmem:[#allocation7 + $0x14] sm:$0xf]
    %v188 = vld [vmem:[#allocation7 + $0x18] sm:$0xf]
    %v189 = vld [vmem:[#allocation7 + $0x1c] sm:$0xf]
    %v190 = vld [vmem:[#allocation7 + $0x20] sm:$0xf]
    %v191 = vld [vmem:[#allocation7 + $0x24] sm:$0xf]
    %v192 = vld [vmem:[#allocation7 + $0x28] sm:$0xf]
    %v193 = vld [vmem:[#allocation7 + $0x2c] sm:$0xf]
    %v194 = vld [vmem:[#allocation7 + $0x30] sm:$0xf]
    %v195 = vld [vmem:[#allocation7 + $0x34] sm:$0xf]
    %v196 = vld [vmem:[#allocation7 + $0x38] sm:$0xf]
    %v197 = vld [vmem:[#allocation7 + $0x3c] sm:$0xf]
    %v198 = vld [vmem:[%s4] sm:$0x1]
    %v199 = vpack.c.bf16 %v181, %v180
    %v201 = vperm.slane %v198, 0
    %v219 = vunpack.c.l.b16 %v182
    %v220 = vunpack.c.l.b16 %v183
    %v221 = vunpack.c.l.b16 %v184
    %v222 = vunpack.c.l.b16 %v185
    %v223 = vunpack.c.l.b16 %v186
    %v224 = vunpack.c.l.b16 %v187
    %v225 = vunpack.c.l.b16 %v188
    %v226 = vunpack.c.l.b16 %v189
    %v227 = vunpack.c.l.b16 %v190
    %v228 = vunpack.c.l.b16 %v191
    %v229 = vunpack.c.l.b16 %v192
    %v230 = vunpack.c.l.b16 %v193
    %v231 = vunpack.c.l.b16 %v194
    %v232 = vunpack.c.l.b16 %v195
    %v233 = vunpack.c.l.b16 %v196
    %v234 = vunpack.c.l.b16 %v197
    %v235 = vpack.c.b16 %v220, %v219
    %v236 = vpack.c.b16 %v222, %v221
    %v237 = vpack.c.b16 %v224, %v223
    %v238 = vpack.c.b16 %v226, %v225
    %v239 = vpack.c.b16 %v228, %v227
    %v240 = vpack.c.b16 %v230, %v229
    %v241 = vpack.c.b16 %v232, %v231
    %v242 = vpack.c.b16 %v234, %v233
    %251 = vmatpush.bf16.msra.mxu0 %v242
    %252 = vmatpush.bf16.msra.mxu0 %v241
    %253 = vmatpush.bf16.msra.mxu0 %v240
    %254 = vmatpush.bf16.msra.mxu0 %v239
    %255 = vmatpush.bf16.msra.mxu0 %v238
    %256 = vmatpush.bf16.msra.mxu0 %v237
    %257 = vmatpush.bf16.msra.mxu0 %v236
    %258 = vmatpush.bf16.msra.mxu0 %v235
    %259 = vmatmul.bf16.gmra.mxu0 %v199
    %v260 = vpop.f32.mrf.mxu0
    %v261 = vadd.f32 %v201, %v260
    %v262 = vpop.f32.mrf.mxu0
    %v263 = vadd.f32 %v201, %v262
    %264 = vdwg.mxu0
    %v265 = vmax.f32 %v261, 0.0
    %v266 = vmax.f32 %v263, 0.0
    %v267 = vld [vmem:[#allocation8] sm:$0xf]
    %v268 = vld [vmem:[#allocation8 + $0x4] sm:$0xf]
    %v269 = vld [vmem:[#allocation8 + $0x8] sm:$0xf]
    %v270 = vld [vmem:[#allocation8 + $0xc] sm:$0xf]
    %v271 = vld [vmem:[#allocation8 + $0x10] sm:$0xf]
    %v272 = vld [vmem:[#allocation8 + $0x14] sm:$0xf]
    %v273 = vld [vmem:[#allocation8 + $0x18] sm:$0xf]
    %v274 = vld [vmem:[#allocation8 + $0x1c] sm:$0xf]
    %v275 = vld [vmem:[#allocation8 + $0x20] sm:$0xf]
    %v276 = vld [vmem:[#allocation8 + $0x24] sm:$0xf]
    %v277 = vld [vmem:[#allocation8 + $0x28] sm:$0xf]
    %v278 = vld [vmem:[#allocation8 + $0x2c] sm:$0xf]
    %v279 = vld [vmem:[#allocation8 + $0x30] sm:$0xf]
    %v280 = vld [vmem:[#allocation8 + $0x34] sm:$0xf]
    %v281 = vld [vmem:[#allocation8 + $0x38] sm:$0xf]
    %v282 = vld [vmem:[#allocation8 + $0x3c] sm:$0xf]
    %v283 = vld [vmem:[%s6] sm:$0x1]
    %v284 = vpack.c.bf16 %v266, %v265
    %v286 = vperm.slane %v283, 0
    %v304 = vunpack.c.l.b16 %v267
    %v305 = vunpack.c.l.b16 %v268
    %v306 = vunpack.c.l.b16 %v269
    %v307 = vunpack.c.l.b16 %v270
    %v308 = vunpack.c.l.b16 %v271
    %v309 = vunpack.c.l.b16 %v272
    %v310 = vunpack.c.l.b16 %v273
    %v311 = vunpack.c.l.b16 %v274
    %v312 = vunpack.c.l.b16 %v275
    %v313 = vunpack.c.l.b16 %v276
    %v314 = vunpack.c.l.b16 %v277
    %v315 = vunpack.c.l.b16 %v278
    %v316 = vunpack.c.l.b16 %v279
    %v317 = vunpack.c.l.b16 %v280
    %v318 = vunpack.c.l.b16 %v281
    %v319 = vunpack.c.l.b16 %v282
    %v320 = vpack.c.b16 %v305, %v304
    %v321 = vpack.c.b16 %v307, %v306
    %v322 = vpack.c.b16 %v309, %v308
    %v323 = vpack.c.b16 %v311, %v310
    %v324 = vpack.c.b16 %v313, %v312
    %v325 = vpack.c.b16 %v315, %v314
    %v326 = vpack.c.b16 %v317, %v316
    %v327 = vpack.c.b16 %v319, %v318
    %336 = vmatpush.bf16.msra.mxu0 %v327
    %337 = vmatpush.bf16.msra.mxu0 %v326
    %338 = vmatpush.bf16.msra.mxu0 %v325
    %339 = vmatpush.bf16.msra.mxu0 %v324
    %340 = vmatpush.bf16.msra.mxu0 %v323
    %341 = vmatpush.bf16.msra.mxu0 %v322
    %342 = vmatpush.bf16.msra.mxu0 %v321
    %343 = vmatpush.bf16.msra.mxu0 %v320
    %344 = vmatmul.bf16.gmra.mxu0 %v284
    %v345 = vpop.f32.mrf.mxu0
    %v346 = vadd.f32 %v286, %v345
    %v347 = vpop.f32.mrf.mxu0
    %v348 = vadd.f32 %v286, %v347
    %349 = vdwg.mxu0
    %350 = vst [vmem:[#allocation10] sm:$0xff] %v346
    %351 = vst [vmem:[#allocation10 + $0x8] sm:$0xff] %v348
    // Predicated region
    $region46: #{tpu_custom_call.1} parent=1 // pred_check
      _
    $region47: #{tpu_custom_call.1} parent=1 // pred_check_branch
      %353 = sbr.rel (0) target = $region49
    $region48: #{tpu_custom_call.1} parent=1 // pred_region
      %355 = vsyncadd [#allocation4], 0
      %s356 = sshll.u32 [#allocation10], 4
      %s357 = int_to_ptr.vmem [resolvable:$true] %s356
      %s358 = sshll.u32 %s7, 4
      %s359 = int_to_ptr.hbm [resolvable:$true] %s358
      %364 = dma.vmem_to_hbm [thread:$0]  %s357, 256, %s359, [#allocation4], 128, 128, 8
    $region49: #{tpu_custom_call.1} parent=1 // pred_fallthru
      _
    // Predicated region
    $region50: #{tpu_custom_call.1} parent=1 // pred_check
      _
    $region51: #{tpu_custom_call.1} parent=1 // pred_check_branch
      %366 = sbr.rel (0) target = $region53
    $region52: #{tpu_custom_call.1} parent=1 // pred_region
      %368 = dma.done [#allocation4], 256
    $region53: #{tpu_custom_call.1} parent=1 // pred_fallthru
      _
    %369 = vsyncpa [#allocation3], 1
    %370 = vsyncpa [#allocation6], 1
    %371 = vsyncpa [#allocation9], 1
    %372 = vsyncpa [#allocation4], 1

</llo_original>
